<compile_context>
chip_gen: v5e
topology: v5e:2x2
jax: 0.10.0
libtpu: 0.0.40
codegen_flags: <defaults>
</compile_context>

<pallas_src>
import jax
import jax.numpy as jnp
from jax.experimental import pallas as pl
from jax.experimental.pallas import tpu as pltpu


def _round_up(x, m):
    return (x + m - 1) // m * m


def _pick_tile(total, cap):
    # Largest multiple of 128 that is <= cap and divides `total`
    # (`total` is itself a multiple of 128, so this terminates at 128).
    t = min(total, cap)
    while total % t:
        t -= 128
    return t


# ----------------------------------------------------------------------------
# Kernel 1: transposed im2col GEMM + per-tile partial channel sum / sumsq
# ----------------------------------------------------------------------------
def conv_stats_kernel(w_ref, p_ref, y_ref, stats_ref):
    # w_ref     : (Coutp, Kp)        bf16  conv weights, channels on sublanes
    # p_ref     : (1, Kp, TCOL)      bf16  im2col patch columns for one sample
    # y_ref     : (1, Coutp, TCOL)   bf16  conv output tile (y^T layout)
    # stats_ref : (1, 1, Coutp, 2)   f32   [:, :, :, 0]=partial sum, 1=sumsq
    acc = jnp.dot(w_ref[...], p_ref[0],
                  preferred_element_type=jnp.float32)      # (Coutp, TCOL) f32
    y_ref[0] = acc.astype(y_ref.dtype)
    # Direct row writes (no concat, no zero-pad rows).
    stats_ref[0, 0, :, 0:1] = jnp.sum(acc, axis=-1, keepdims=True)
    stats_ref[0, 0, :, 1:2] = jnp.sum(acc * acc, axis=-1, keepdims=True)


# ----------------------------------------------------------------------------
# Kernel 2: BatchNorm (precomputed per-channel scale/shift) + ReLU
# ----------------------------------------------------------------------------
def bn_relu_kernel(y_ref, scale_ref, shift_ref, o_ref):
    # y_ref : (1, Coutp, TCOL2) bf16 ; scale/shift : (Coutp, 1) f32
    # o_ref : (1, Coutp, TCOL2) f32
    y = y_ref[0].astype(jnp.float32)
    o_ref[0] = jnp.maximum(y * scale_ref[...] + shift_ref[...], 0.0)


# ----------------------------------------------------------------------------
# Wrapper (NCHW in / NCHW out, matching the PyTorch module)
# ----------------------------------------------------------------------------
def skip_con_same_height(x_nchw, w_oihw, bias, gamma, beta, eps=1e-5):
    del bias  # cancelled exactly by the training-mode BatchNorm batch mean
    N, Cin, H, W = x_nchw.shape
    Cout = w_oihw.shape[0]
    HW = H * W
    K = 9 * Cin

    Kp = _round_up(K, 8)         # contraction dim lives on sublanes: pad to 8
    Coutp = _round_up(Cout, 8)   # output channels live on sublanes: pad to 8
    HWp = _round_up(HW, 128)     # lane-dense spatial/column dim

    # Column tiles: big (mem-bound kernels want >=512-1024 wide tiles), but
    # keep >= 2 total grid steps so v7x's two TensorCores both get work.
    tcol1 = _pick_tile(HWp, 1024)
    if N * (HWp // tcol1) < 2 and tcol1 > 128:
        tcol1 = _pick_tile(HWp, tcol1 // 2)
    ncol1 = HWp // tcol1

    tcol2 = _pick_tile(HWp, 2048)
    if N * (HWp // tcol2) < 2 and tcol2 > 128:
        tcol2 = _pick_tile(HWp, tcol2 // 2)
    ncol2 = HWp // tcol2

    # --- layout glue (pure XLA, outside the kernels) -------------------------
    # Transposed im2col: patches^T[n, (kh*3+kw)*Cin + i, h*W + w]
    #                      = x_pad[n, i, h+kh, w+kw]
    x_f = x_nchw.astype(jnp.float32)
    xp = jnp.pad(x_f, ((0, 0), (0, 0), (1, 1), (1, 1)))
    taps = [xp[:, :, kh:kh + H, kw:kw + W]
            for kh in range(3) for kw in range(3)]          # each (N,Cin,H,W)
    pt = jnp.stack(taps, axis=1).reshape(N, K, HW)          # (N, 9*Cin, H*W)
    pt = jnp.pad(pt, ((0, 0), (0, Kp - K), (0, HWp - HW)))
    pt = pt.astype(jnp.bfloat16)                            # (N, Kp, HWp)

    # Weights: OIHW -> (o, kh, kw, i) -> (Cout, 9*Cin) -> padded (Coutp, Kp)
    wt = jnp.transpose(w_oihw.astype(jnp.float32), (0, 2, 3, 1)).reshape(Cout, K)
    wt = jnp.pad(wt, ((0, Coutp - Cout), (0, Kp - K))).astype(jnp.bfloat16)

    # --- kernel 1: conv GEMM + partial batch stats ----------------------------
    conv_fn = pl.pallas_call(
        conv_stats_kernel,
        out_shape=(
            jax.ShapeDtypeStruct((N, Coutp, HWp), jnp.bfloat16),      # y^T
            jax.ShapeDtypeStruct((N, ncol1, Coutp, 2), jnp.float32),  # partials
        ),
        grid_spec=pltpu.PrefetchScalarGridSpec(
            num_scalar_prefetch=0,
            grid=(N, ncol1),
            in_specs=[
                pl.BlockSpec((Coutp, Kp), lambda n, c: (0, 0)),
                pl.BlockSpec((1, Kp, tcol1), lambda n, c: (n, 0, c)),
            ],
            out_specs=[
                pl.BlockSpec((1, Coutp, tcol1), lambda n, c: (n, 0, c)),
                pl.BlockSpec((1, 1, Coutp, 2), lambda n, c: (n, c, 0, 0)),
            ],
        ),
        compiler_params=pltpu.CompilerParams(
            dimension_semantics=("parallel", "parallel")),
    )
    y_t, stats = conv_fn(wt, pt)

    # --- tiny scalar glue: batch statistics -> BN scale/shift -----------------
    # Padded spatial columns / channels contribute exact zeros, so dividing by
    # the true element count N*H*W is correct.
    cnt = jnp.float32(N * HW)
    ch_sum = jnp.sum(stats[..., 0], axis=(0, 1))        # (Coutp,)
    ch_sumsq = jnp.sum(stats[..., 1], axis=(0, 1))      # (Coutp,)
    mean = ch_sum / cnt
    var = jnp.maximum(ch_sumsq / cnt - mean * mean, 0.0)   # clamp: no NaNs

    gamma_p = jnp.pad(gamma.astype(jnp.float32), (0, Coutp - Cout))
    beta_p = jnp.pad(beta.astype(jnp.float32), (0, Coutp - Cout))
    scale1 = gamma_p * jax.lax.rsqrt(var + eps)
    shift1 = beta_p - mean * scale1
    scale = scale1.reshape(Coutp, 1)    # per-channel == per-sublane now
    shift = shift1.reshape(Coutp, 1)

    # --- kernel 2: normalize + affine + ReLU (lane-dense, NCHW-native) --------
    bn_fn = pl.pallas_call(
        bn_relu_kernel,
        out_shape=jax.ShapeDtypeStruct((N, Coutp, HWp), jnp.float32),
        grid_spec=pltpu.PrefetchScalarGridSpec(
            num_scalar_prefetch=0,
            grid=(N, ncol2),
            in_specs=[
                pl.BlockSpec((1, Coutp, tcol2), lambda n, c: (n, 0, c)),
                pl.BlockSpec((Coutp, 1), lambda n, c: (0, 0)),
                pl.BlockSpec((Coutp, 1), lambda n, c: (0, 0)),
            ],
            out_specs=pl.BlockSpec((1, Coutp, tcol2), lambda n, c: (n, 0, c)),
        ),
        compiler_params=pltpu.CompilerParams(
            dimension_semantics=("parallel", "parallel")),
    )
    out_t = bn_fn(y_t, scale, shift)                     # (N, Coutp, HWp) f32

    # Strip padding; the layout is already flat NCHW -> no transpose needed.
    return out_t[:, :Cout, :HW].reshape(N, Cout, H, W)


# ----------------------------------------------------------------------------
# Pure-JAX f32 reference (for correctness check)
# ----------------------------------------------------------------------------
def reference(x_nchw, w_oihw, bias, gamma, beta, eps=1e-5):
    y = jax.lax.conv_general_dilated(
        x_nchw, w_oihw, window_strides=(1, 1), padding=((1, 1), (1, 1)),
        dimension_numbers=("NCHW", "OIHW", "NCHW"))
    y = y + bias.reshape(1, -1, 1, 1)
    mean = jnp.mean(y, axis=(0, 2, 3), keepdims=True)
    var = jnp.mean((y - mean) ** 2, axis=(0, 2, 3), keepdims=True)
    y = (y - mean) * jax.lax.rsqrt(var + eps)
    y = y * gamma.reshape(1, -1, 1, 1) + beta.reshape(1, -1, 1, 1)
    return jnp.maximum(y, 0.0)


if __name__ == "__main__":
    key = jax.random.PRNGKey(0)
    k_x, k_w, k_b = jax.random.split(key, 3)

    N, Cin, Cout, H, W = 2, 4, 8, 16, 16

    x = jax.random.normal(k_x, (N, Cin, H, W), dtype=jnp.float32)
    # Conv2d params (PyTorch layout OIHW); deterministic synthetic init.
    w = jax.random.normal(k_w, (Cout, Cin, 3, 3), dtype=jnp.float32) * 0.1
    b = jax.random.normal(k_b, (Cout,), dtype=jnp.float32) * 0.1
    # BatchNorm2d default affine init: gamma=1, beta=0.
    gamma = jnp.ones((Cout,), jnp.float32)
    beta = jnp.zeros((Cout,), jnp.float32)

    out = skip_con_same_height(x, w, b, gamma, beta)
    out = jax.block_until_ready(out)

    ref = reference(x, w, b, gamma, beta)
    assert out.shape == (N, Cout, H, W)
    # Tolerance is loosened vs. the f32 reference because the kernel uses the
    # bf16 MXU-input path (patches/weights) and a bf16 staging buffer for the
    # pre-normalization conv output, per the performance review.
    assert jnp.allclose(out, ref, atol=5e-2, rtol=5e-2), "mismatch vs reference"

    print("KERNEL_OK")
</pallas_src>

<mosaic_0001>
module attributes {stable_mosaic.version = 11 : i64} {
  func.func @conv_stats_kernel(%arg0: i32, %arg1: i32, %arg2: memref<8x40xbf16, #tpu.memory_space<vmem>>, %arg3: memref<1x40x256xbf16, #tpu.memory_space<vmem>>, %arg4: memref<1x8x256xbf16, #tpu.memory_space<vmem>>, %arg5: memref<1x1x8x2xf32, #tpu.memory_space<vmem>>) attributes {dimension_semantics = [#tpu.dimension_semantics<parallel>, #tpu.dimension_semantics<parallel>], iteration_bounds = array<i64: 2, 1>, scalar_prefetch = 0 : i64, scratch_operands = 0 : i64, tpu.core_type = #tpu.core_type<tc>, window_params = [{pipeline_mode = #tpu.pipeline_mode<synchronous>, transform_indices = @transform_0, window_bounds = array<i64: 8, 40>}, {transform_indices = @transform_1, window_bounds = array<i64: 1, 40, 256>}, {transform_indices = @transform_2, window_bounds = array<i64: 1, 8, 256>}, {transform_indices = @transform_3, window_bounds = array<i64: 1, 1, 8, 2>}]} {
    %c0 = arith.constant 0 : index
    %c0_0 = arith.constant 0 : index
    %0 = vector.load %arg2[%c0, %c0_0] : memref<8x40xbf16, #tpu.memory_space<vmem>>, vector<8x40xbf16>
    %c0_1 = arith.constant 0 : index
    %c0_2 = arith.constant 0 : index
    %c0_3 = arith.constant 0 : index
    %1 = vector.load %arg3[%c0_1, %c0_2, %c0_3] : memref<1x40x256xbf16, #tpu.memory_space<vmem>>, vector<1x40x256xbf16>
    %2 = vector.shape_cast %1 : vector<1x40x256xbf16> to vector<40x256xbf16>
    %cst = arith.constant dense<0.000000e+00> : vector<8x256xf32>
    %3 = tpu.matmul %0, %2, %cst {dimension_numbers = #tpu.dot_dimension_numbers<[1], [0], [0], [1], [0, 0, 1, 1], [], []>} : vector<8x40xbf16>, vector<40x256xbf16>, vector<8x256xf32> -> vector<8x256xf32>
    %4 = arith.truncf %3 : vector<8x256xf32> to vector<8x256xbf16>
    %c0_4 = arith.constant 0 : index
    %c0_5 = arith.constant 0 : index
    %c0_6 = arith.constant 0 : index
    %5 = vector.load %arg4[%c0_4, %c0_5, %c0_6] : memref<1x8x256xbf16, #tpu.memory_space<vmem>>, vector<1x8x256xbf16>
    %6 = vector.shape_cast %5 : vector<1x8x256xbf16> to vector<8x256xbf16>
    %7 = vector.shape_cast %4 : vector<8x256xbf16> to vector<1x8x256xbf16>
    tpu.vector_store %arg4[%c0_4, %c0_5, %c0_6], %7 {strides = array<i32>} : memref<1x8x256xbf16, #tpu.memory_space<vmem>>, vector<1x8x256xbf16>,
    %cst_7 = arith.constant dense<0.000000e+00> : vector<8xf32>
    %8 = vector.multi_reduction <add>, %3, %cst_7 [1] : vector<8x256xf32> to vector<8xf32>
    %9 = vector.shape_cast %8 : vector<8xf32> to vector<8x1xf32>
    %c0_8 = arith.constant 0 : index
    %c0_9 = arith.constant 0 : index
    %c0_10 = arith.constant 0 : index
    %c0_11 = arith.constant 0 : index
    %10 = vector.load %arg5[%c0_8, %c0_9, %c0_10, %c0_11] : memref<1x1x8x2xf32, #tpu.memory_space<vmem>>, vector<1x1x8x1xf32>
    %11 = vector.shape_cast %10 : vector<1x1x8x1xf32> to vector<8x1xf32>
    %12 = vector.shape_cast %9 : vector<8x1xf32> to vector<1x1x8x1xf32>
    tpu.vector_store %arg5[%c0_8, %c0_9, %c0_10, %c0_11], %12 {strides = array<i32>} : memref<1x1x8x2xf32, #tpu.memory_space<vmem>>, vector<1x1x8x1xf32>,
    %13 = arith.mulf %3, %3 : vector<8x256xf32>
    %cst_12 = arith.constant dense<0.000000e+00> : vector<8xf32>
    %14 = vector.multi_reduction <add>, %13, %cst_12 [1] : vector<8x256xf32> to vector<8xf32>
    %15 = vector.shape_cast %14 : vector<8xf32> to vector<8x1xf32>
    %c0_13 = arith.constant 0 : index
    %c0_14 = arith.constant 0 : index
    %c0_15 = arith.constant 0 : index
    %c1 = arith.constant 1 : index
    %16 = vector.load %arg5[%c0_13, %c0_14, %c0_15, %c1] : memref<1x1x8x2xf32, #tpu.memory_space<vmem>>, vector<1x1x8x1xf32>
    %17 = vector.shape_cast %16 : vector<1x1x8x1xf32> to vector<8x1xf32>
    %18 = vector.shape_cast %15 : vector<8x1xf32> to vector<1x1x8x1xf32>
    tpu.vector_store %arg5[%c0_13, %c0_14, %c0_15, %c1], %18 {strides = array<i32>} : memref<1x1x8x2xf32, #tpu.memory_space<vmem>>, vector<1x1x8x1xf32>,
    return
  }
  func.func @transform_0(%arg0: i32, %arg1: i32) -> (i32, i32) {
    %c0_i32 = arith.constant 0 : i32
    %c0_i32_0 = arith.constant 0 : i32
    %c0_i32_1 = arith.constant 0 : i32
    return %c0_i32, %c0_i32_0 : i32, i32
  }
  func.func @transform_1(%arg0: i32, %arg1: i32) -> (i32, i32, i32) {
    %c0_i32 = arith.constant 0 : i32
    %c0_i32_0 = arith.constant 0 : i32
    return %arg0, %c0_i32, %arg1 : i32, i32, i32
  }
  func.func @transform_2(%arg0: i32, %arg1: i32) -> (i32, i32, i32) {
    %c0_i32 = arith.constant 0 : i32
    %c0_i32_0 = arith.constant 0 : i32
    return %arg0, %c0_i32, %arg1 : i32, i32, i32
  }
  func.func @transform_3(%arg0: i32, %arg1: i32) -> (i32, i32, i32, i32) {
    %c0_i32 = arith.constant 0 : i32
    %c0_i32_0 = arith.constant 0 : i32
    %c0_i32_1 = arith.constant 0 : i32
    return %arg0, %arg1, %c0_i32, %c0_i32_0 : i32, i32, i32, i32
  }
}

</mosaic_0001>

<llo_original>
// kernel: tpu_custom_call.1
$region0: #{tpu_custom_call.1}
  #allocation0 [shape = 'u32[]', space=smem, size = 0x4, offset = 0x4, fixed_abs, tag = 'smem constant byte address 0x4 - core index']
  #allocation1 [shape = 'u32[72,128]{1,0:T(1,128)}', space=vmem, size = 0x9000, scoped, tag = 'internal scratch']
  %s0 = inlined_call_operand.hbm [shape: bf16[8,40], index: 0, kind: input, shape index: {}]
  %s1 = inlined_call_operand.hbm [shape: bf16[2,40,256], index: 1, kind: input, shape index: {}]
  %s2 = inlined_call_operand.hbm [shape: bf16[2,8,256], index: 2, kind: output, shape index: {0}]
  %s3 = inlined_call_operand.vmem [shape: f32[2,1,8,2], index: 3, kind: output, shape index: {1}]
  %4 = xla_tuple %s2, %s3
  %s5 = sld [smem:[#allocation0]]
  $region57: #{tpu_custom_call.1} parent=0
    _
  %s7 = ssub.s32 1, %s5
  %s8 = scalar_select 0, %s7, %s5
  $region1: #{tpu_custom_call.1} parent=0
    #allocation2 [shape = 'u8[2048]{0}', space=vmem, size = 0x800, scoped, tag = 'input window, operand 0, single buffered']
    #allocation3 [shape = 's32[2]{0}', space=sflag, size = 0x8, scoped, tag = 'scoped memory for tpu_custom_call.1']
    #allocation4 [shape = 's32[2]{0}', space=sflag, size = 0x8, scoped, tag = 'scoped memory for tpu_custom_call.1']
    #allocation5 [shape = 'u8[40960]{0}', space=vmem, size = 0xa000, scoped, tag = 'input window, operand 1']
    #allocation6 [shape = 's32[2]{0}', space=sflag, size = 0x8, scoped, tag = 'scoped memory for tpu_custom_call.1']
    #allocation7 [shape = 'u8[8192]{0}', space=vmem, size = 0x2000, scoped, tag = 'output window, operand 0']
    %9 = vsyncpa [#allocation3], 0
    %10 = vsyncpa [#allocation6], 0
    %s11 = scalar_lea.sflag [#allocation6], 1
    %12 = vsyncpa %s11, 0
    %13 = vsyncpa [#allocation4], 0
    %s14 = scalar_lea.sflag [#allocation4], 1
    %15 = vsyncpa %s14, 0
    loop: start=0, step=1, limit=4
    $region2: #{tpu_custom_call.1} parent=1 // loop_pre_header
      _
    $region3: #{tpu_custom_call.1} parent=1 // loop_header
      %s17 = sphi 0, %s21
      %p18 = scmp.ge.s32.totalorder %s17, 4
      %s24 = sphi 0, %s36
      %s25 = sphi 0, %s32
      %s26 = sphi 0, %s24
      %s27 = sphi 0, %s25
      %s28 = sphi 0, %s26
      %s29 = sphi 0, %s27
      %s37 = sphi 0, %s37
      %s39 = sphi 0, %s37
      %s40 = sphi 0, %s39
      %s54 = sphi 0, %s40
      %s62 = sphi 0, %s64
      %s65 = sphi 0, %s62
      %s66 = sphi 0, %s65
      %s82 = sphi 0, %s66
      %s90 = sphi 0, %s92
      %s93 = sphi 0, %s90
      %s94 = sphi 0, %s93
      %s110 = sphi 0, %s94
      %s118 = sphi 0, %s120
      %s121 = sphi 0, %s118
      %s122 = sphi 0, %s121
      %s138 = sphi 0, %s122
    $region4: #{tpu_custom_call.1} parent=1 // loop_header_branch
      %20 = sbr.rel (%p18) target = $region8
    $region5: #{tpu_custom_call.1} parent=1 // loop_body
      %s22 = ssub.s32 %s17, 1
      %s23 = ssub.s32 %s17, 2
      %s30 = sadd.s32 1, %s25
      %p31 = scmp.ge.s32.totalorder %s30, 1
      %s32 = scalar_select %p31, 0, %s30
      %s33 = sadd.s32 1, %s24
      %s34 = scalar_select %p31, %s33, %s24
      %p35 = scmp.ge.s32.totalorder %s34, 2
      %s36 = scalar_select %p35, 0, %s34
      %s38 = sadd.s32 %s37, 1
      %p41 = scmp.eq.s32.totalorder %s17, 1
      %p42 = scmp.ne.s32.totalorder %s37, %s39
      %p43 = scmp.eq.s32.totalorder %s17, 0
      %p44 = por %p42, %p43
      %p45 = scmp.ne.s32.totalorder %s37, %s39
      %p46 = scmp.eq.s32.totalorder %s22, 1
      %p47 = por %p45, %p46
      %p48 = scmp.ne.s32.totalorder %s39, %s40
      %p49 = scmp.eq.s32.totalorder %s22, 0
      %p50 = por %p48, %p49
      %p51 = scmp.ne.s32.totalorder %s39, %s40
      %p52 = scmp.eq.s32.totalorder %s23, 1
      %p53 = por %p51, %p52
      %p55 = scmp.ne.s32.totalorder %s40, %s54
      %p56 = scmp.eq.s32.totalorder %s23, 0
      %p57 = por %p55, %p56
      %s58 = ssub.s32 %s24, %s36
      %s59 = ssub.s32 %s25, %s32
      %s60 = sor.u32 %s58, %s59
      %p61 = scmp.eq.s32.totalorder %s60, 0
      %s63 = sadd.s32 %s62, 1
      %s64 = scalar_select %p61, %s62, %s63
      %p67 = pneg %p61
      %p68 = scmp.eq.s32.totalorder %s17, 1
      %p69 = por %p67, %p68
      %p70 = scmp.ne.s32.totalorder %s62, %s65
      %p71 = scmp.eq.s32.totalorder %s17, 0
      %p72 = por %p70, %p71
      %p73 = scmp.ne.s32.totalorder %s62, %s65
      %p74 = scmp.eq.s32.totalorder %s22, 1
      %p75 = por %p73, %p74
      %p76 = scmp.ne.s32.totalorder %s65, %s66
      %p77 = scmp.eq.s32.totalorder %s22, 0
      %p78 = por %p76, %p77
      %p79 = scmp.ne.s32.totalorder %s65, %s66
      %p80 = scmp.eq.s32.totalorder %s23, 1
      %p81 = por %p79, %p80
      %p83 = scmp.ne.s32.totalorder %s66, %s82
      %p84 = scmp.eq.s32.totalorder %s23, 0
      %p85 = por %p83, %p84
      %s86 = ssub.s32 %s24, %s36
      %s87 = ssub.s32 %s25, %s32
      %s88 = sor.u32 %s86, %s87
      %p89 = scmp.eq.s32.totalorder %s88, 0
      %s91 = sadd.s32 %s90, 1
      %s92 = scalar_select %p89, %s90, %s91
      %p95 = pneg %p89
      %p96 = scmp.eq.s32.totalorder %s17, 1
      %p97 = por %p95, %p96
      %p98 = scmp.ne.s32.totalorder %s90, %s93
      %p99 = scmp.eq.s32.totalorder %s17, 0
      %p100 = por %p98, %p99
      %p101 = scmp.ne.s32.totalorder %s90, %s93
      %p102 = scmp.eq.s32.totalorder %s22, 1
      %p103 = por %p101, %p102
      %p104 = scmp.ne.s32.totalorder %s93, %s94
      %p105 = scmp.eq.s32.totalorder %s22, 0
      %p106 = por %p104, %p105
      %p107 = scmp.ne.s32.totalorder %s93, %s94
      %p108 = scmp.eq.s32.totalorder %s23, 1
      %p109 = por %p107, %p108
      %p111 = scmp.ne.s32.totalorder %s94, %s110
      %p112 = scmp.eq.s32.totalorder %s23, 0
      %p113 = por %p111, %p112
      %s114 = ssub.s32 %s24, %s36
      %s115 = ssub.s32 %s25, %s32
      %s116 = sor.u32 %s114, %s115
      %p117 = scmp.eq.s32.totalorder %s116, 0
      %s119 = sadd.s32 %s118, 1
      %s120 = scalar_select %p117, %s118, %s119
      %p123 = pneg %p117
      %p124 = scmp.eq.s32.totalorder %s17, 1
      %p125 = por %p123, %p124
      %p126 = scmp.ne.s32.totalorder %s118, %s121
      %p127 = scmp.eq.s32.totalorder %s17, 0
      %p128 = por %p126, %p127
      %p129 = scmp.ne.s32.totalorder %s118, %s121
      %p130 = scmp.eq.s32.totalorder %s22, 1
      %p131 = por %p129, %p130
      %p132 = scmp.ne.s32.totalorder %s121, %s122
      %p133 = scmp.eq.s32.totalorder %s22, 0
      %p134 = por %p132, %p133
      %p135 = scmp.ne.s32.totalorder %s121, %s122
      %p136 = scmp.eq.s32.totalorder %s23, 1
      %p137 = por %p135, %p136
      %p139 = scmp.ne.s32.totalorder %s122, %s138
      %p140 = scmp.eq.s32.totalorder %s23, 0
      %p141 = por %p139, %p140
      %p142 = scmp.le.s32.totalorder 1, %s17
      %p143 = scmp.lt.s32.totalorder %s17, 3
      %p144 = pnand %p142, %p143
      %p145 = pneg %p144
      // Predicated region
      $region9: #{tpu_custom_call.1} parent=5 // pred_check
        _
      $region10: #{tpu_custom_call.1} parent=5 // pred_check_branch
        %147 = sbr.rel (%p144) target = $region12
      $region11: #{tpu_custom_call.1} parent=5 // pred_region
        %s148 = ssub.s32 %s17, 1
        // Predicated region
        $region13: #{tpu_custom_call.1} parent=11 // pred_check
          %p149 = pneg %p50
        $region14: #{tpu_custom_call.1} parent=11 // pred_check_branch
          %151 = sbr.rel (%p149) target = $region16
        $region15: #{tpu_custom_call.1} parent=11 // pred_region
          %153 = vsyncadd [#allocation3], 0
          %s155 = sshll.u32 %s0, 4
          %s156 = int_to_ptr.hbm [resolvable:$true] %s155
          %s157 = sshll.u32 [#allocation2], 4
          %s158 = int_to_ptr.vmem [resolvable:$true] %s157
          %160 = dma.hbm_to_vmem [thread:$0]  %s156, 64, %s158, [#allocation3]
        $region16: #{tpu_custom_call.1} parent=11 // pred_fallthru
          _
      $region12: #{tpu_custom_call.1} parent=5 // pred_fallthru
        _
      %p161 = scmp.lt.s32.totalorder %s17, 2
      // Predicated region
      $region17: #{tpu_custom_call.1} parent=5 // pred_check
        %p162 = pneg %p161
      $region18: #{tpu_custom_call.1} parent=5 // pred_check_branch
        %164 = sbr.rel (%p162) target = $region20
      $region19: #{tpu_custom_call.1} parent=5 // pred_region
        // Predicated region
        $region21: #{tpu_custom_call.1} parent=19 // pred_check
          %p165 = pneg %p72
        $region22: #{tpu_custom_call.1} parent=19 // pred_check_branch
          %167 = sbr.rel (%p165) target = $region24
        $region23: #{tpu_custom_call.1} parent=19 // pred_region
          %s168 = sand.u32 %s62, 1
          %s169 = scalar_lea.sflag [#allocation6], %s168
          %s170 = sand.u32 %s62, 1
          %s171 = smul.addr %s170, 40
          %s172 = scalar_lea.vmem [#allocation5], %s171
          %s173 = smul.u32 2, %s25
          %175 = vsyncadd %s169, 0
          %s176 = smul.addr %s24, 10
          %s177 = sadd.s32 %s173, %s176
          %s178 = smul.addr %s177, 4
          %s179 = scalar_lea.hbm %s1, %s178
          %s180 = sshll.u32 %s179, 4
          %s181 = int_to_ptr.hbm [resolvable:$true] %s180
          %s182 = sshll.u32 %s172, 4
          %s183 = int_to_ptr.vmem [resolvable:$true] %s182
          %188 = dma.hbm_to_vmem [thread:$0]  %s181, 640, %s183, %s169, 128, 128, 8
        $region24: #{tpu_custom_call.1} parent=19 // pred_fallthru
          _
      $region20: #{tpu_custom_call.1} parent=5 // pred_fallthru
        _
      %p189 = scmp.le.s32.totalorder 1, %s17
      %p190 = scmp.lt.s32.totalorder %s17, 3
      %p191 = pnand %p189, %p190
      %p192 = pneg %p191
      // Predicated region
      $region25: #{tpu_custom_call.1} parent=5 // pred_check
        _
      $region26: #{tpu_custom_call.1} parent=5 // pred_check_branch
        %194 = sbr.rel (%p191) target = $region28
      $region27: #{tpu_custom_call.1} parent=5 // pred_region
        %s195 = ssub.s32 %s17, 1
        // Predicated region
        $region29: #{tpu_custom_call.1} parent=27 // pred_check
          %p196 = pneg %p50
        $region30: #{tpu_custom_call.1} parent=27 // pred_check_branch
          %198 = sbr.rel (%p196) target = $region32
        $region31: #{tpu_custom_call.1} parent=27 // pred_region
          %200 = dma.done [#allocation3], 64
        $region32: #{tpu_custom_call.1} parent=27 // pred_fallthru
          _
        %s201 = sand.u32 %s65, 1
        %s202 = scalar_lea.sflag [#allocation6], %s201
        %s203 = sand.u32 %s65, 1
        %s204 = smul.addr %s203, 40
        %s205 = scalar_lea.vmem [#allocation5], %s204
        // Predicated region
        $region33: #{tpu_custom_call.1} parent=27 // pred_check
          %p206 = pneg %p78
        $region34: #{tpu_custom_call.1} parent=27 // pred_check_branch
          %208 = sbr.rel (%p206) target = $region36
        $region35: #{tpu_custom_call.1} parent=27 // pred_region
          %210 = dma.done %s202, 640
        $region36: #{tpu_custom_call.1} parent=27 // pred_fallthru
          _
        %p211 = pneg %p50
        %p212 = pneg %p47
        %s213 = sand.u32 %s65, 1
        %s214 = scalar_lea.sflag [#allocation6], %s213
        %s215 = sand.u32 %s65, 1
        %s216 = smul.addr %s215, 40
        %s217 = scalar_lea.vmem [#allocation5], %s216
        %p218 = pneg %p78
        %p219 = pneg %p75
        %p220 = pneg %p106
        %p221 = pneg %p103
        %s222 = sand.u32 %s93, 1
        %s223 = scalar_lea.sflag [#allocation4], %s222
        %s224 = sand.u32 %s93, 1
        %s225 = smul.addr %s224, 8
        %s226 = scalar_lea.vmem [#allocation7], %s225
        %p227 = pneg %p134
        %p228 = pneg %p131
        %p229 = scmp.lt.s32.totalorder %s26, 1
        %s230 = scalar_select %p229, %s26, 1
        %p231 = scmp.lt.s32.totalorder %s27, 0
        %s232 = scalar_select %p231, %s27, 0
        %s233 = sadd.s32 %s232, %s230
        %s234 = smul.addr %s233, 8
        %s235 = scalar_lea.vmem %s3, %s234
        %s236 = smul.u32 2, %s27
        %s237 = smul.u32 2, %s27
        %p238 = scmp.lt.s32.totalorder %s26, 1
        %s239 = scalar_select %p238, %s26, 1
        %p240 = scmp.lt.s32.totalorder %s27, 0
        %s241 = scalar_select %p240, %s27, 0
        %s242 = sadd.s32 %s241, %s239
        %s243 = smul.addr %s242, 8
        %s244 = scalar_lea.vmem %s3, %s243
        %v246 = vld [vmem:[#allocation2] sm:$0xf]
        %v247 = vld [vmem:[%s205] sm:$0xff]
        %v248 = vld [vmem:[%s205 + $0x8] sm:$0xff]
        %v249 = vld [vmem:[%s205 + $0x10] sm:$0xff]
        %v250 = vld [vmem:[%s205 + $0x18] sm:$0xff]
        %v251 = vld [vmem:[%s205 + $0x20] sm:$0xff]
        %v257 = vunpack.c.l.b16 %v247
        %v258 = vunpack.c.h.b16 %v247
        %v259 = vunpack.c.l.b16 %v248
        %v260 = vunpack.c.h.b16 %v248
        %v261 = vunpack.c.l.b16 %v249
        %v262 = vunpack.c.h.b16 %v249
        %v263 = vunpack.c.l.b16 %v250
        %v264 = vunpack.c.h.b16 %v250
        %v265 = vunpack.c.l.b16 %v251
        %v266 = vunpack.c.h.b16 %v251
        %v267 = vpack.c.b16 %v259, %v257
        %v268 = vpack.c.b16 %v260, %v258
        %v269 = vpack.c.b16 %v263, %v261
        %v270 = vpack.c.b16 %v264, %v262
        %v271 = vpack.c.b16 %v265, %v265
        %v272 = vpack.c.b16 %v266, %v266
        %vm277 = vcmask 326656
        %v279 = vsel %vm277, %v246, 0
        %vm281 = vcmask 1043456
        %v283 = vsel %vm281, %v271, 0
        %v286 = vsel %vm281, %v272, 0
        %288 = vmatpush.bf16.msra.mxu0 0
        %289 = vmatpush.bf16.msra.mxu0 0
        %290 = vmatpush.bf16.msra.mxu0 0
        %291 = vmatpush.bf16.msra.mxu0 0
        %292 = vmatpush.bf16.msra.mxu0 0
        %293 = vmatpush.bf16.msra.mxu0 %v283
        %294 = vmatpush.bf16.msra.mxu0 %v269
        %295 = vmatpush.bf16.msra.mxu0 %v267
        %296 = vmatmul.bf16.gmra.mxu0 %v279
        %v297 = vpop.f32.mrf.mxu0
        %v298 = vadd.f32 0.0, %v297
        %v299 = vpop.f32.mrf.mxu0
        %300 = vdwg.mxu0
        %301 = vmatpush.bf16.msra.mxu0 0
        %302 = vmatpush.bf16.msra.mxu0 0
        %303 = vmatpush.bf16.msra.mxu0 0
        %304 = vmatpush.bf16.msra.mxu0 0
        %305 = vmatpush.bf16.msra.mxu0 0
        %306 = vmatpush.bf16.msra.mxu0 %v286
        %307 = vmatpush.bf16.msra.mxu0 %v270
        %308 = vmatpush.bf16.msra.mxu0 %v268
        %309 = vmatmul.bf16.gmra.mxu0 %v279
        %v310 = vpop.f32.mrf.mxu0
        %v311 = vadd.f32 0.0, %v310
        %v312 = vpop.f32.mrf.mxu0
        %313 = vdwg.mxu0
        %v314 = vpack.c.bf16 %v311, %v298
        %315 = vst [vmem:[%s226] sm:$0xff] %v314
        %v316 = vadd.f32 %v298, %v311
        %317 = vadd.xlane.f32.xlu0 %v316
        %v318 = vpop.xlane.xlu0 %317
        %vm319 = vcmask 7168
        %320 = vst.msk [vmem:[%s244] sm:$0xff] %vm319, %v318
        %v321 = vmul.f32 %v298, %v298
        %v322 = vmul.f32 %v311, %v311
        %v323 = vadd.f32 %v321, %v322
        %324 = vadd.xlane.f32.xlu0 %v323
        %v325 = vpop.xlane.xlu0 %324
        %vm326 = vcmask 15368
        %327 = vst.msk [vmem:[%s244] sm:$0xff] %vm326, %v325
        %s328 = sand.u32 %s93, 1
        %s329 = scalar_lea.sflag [#allocation4], %s328
        %s330 = sand.u32 %s93, 1
        %s331 = smul.addr %s330, 8
        %s332 = scalar_lea.vmem [#allocation7], %s331
        %p333 = scmp.lt.s32.totalorder %s26, 1
        %s334 = scalar_select %p333, %s26, 1
        %p335 = scmp.lt.s32.totalorder %s27, 0
        %s336 = scalar_select %p335, %s27, 0
        %s337 = sadd.s32 %s336, %s334
        %s338 = smul.addr %s337, 8
        %s339 = scalar_lea.vmem %s3, %s338
        // Predicated region
        $region37: #{tpu_custom_call.1} parent=27 // pred_check
          %p340 = pneg %p103
        $region38: #{tpu_custom_call.1} parent=27 // pred_check_branch
          %342 = sbr.rel (%p340) target = $region40
        $region39: #{tpu_custom_call.1} parent=27 // pred_region
          %s343 = smul.u32 2, %s27
          %345 = vsyncadd %s329, 0
          %s346 = smul.addr %s26, 2
          %s347 = sadd.s32 %s343, %s346
          %s348 = smul.addr %s347, 4
          %s349 = scalar_lea.hbm %s2, %s348
          %s351 = sshll.u32 %s332, 4
          %s352 = int_to_ptr.vmem [resolvable:$true] %s351
          %s353 = sshll.u32 %s349, 4
          %s354 = int_to_ptr.hbm [resolvable:$true] %s353
          %356 = dma.vmem_to_hbm [thread:$0]  %s352, 128, %s354, %s329
        $region40: #{tpu_custom_call.1} parent=27 // pred_fallthru
          _
        // Predicated region
        $region41: #{tpu_custom_call.1} parent=27 // pred_check
          %p357 = pneg %p131
        $region42: #{tpu_custom_call.1} parent=27 // pred_check_branch
          %359 = sbr.rel (%p357) target = $region44
        $region43: #{tpu_custom_call.1} parent=27 // pred_region
          _
        $region44: #{tpu_custom_call.1} parent=27 // pred_fallthru
          _
      $region28: #{tpu_custom_call.1} parent=5 // pred_fallthru
        _
      %p360 = scmp.le.s32.totalorder 2, %s17
      // Predicated region
      $region45: #{tpu_custom_call.1} parent=5 // pred_check
        %p361 = pneg %p360
      $region46: #{tpu_custom_call.1} parent=5 // pred_check_branch
        %363 = sbr.rel (%p361) target = $region48
      $region47: #{tpu_custom_call.1} parent=5 // pred_region
        %s364 = ssub.s32 %s17, 2
        // Predicated region
        $region49: #{tpu_custom_call.1} parent=47 // pred_check
          %p365 = pneg %p109
        $region50: #{tpu_custom_call.1} parent=47 // pred_check_branch
          %367 = sbr.rel (%p365) target = $region52
        $region51: #{tpu_custom_call.1} parent=47 // pred_region
          %s368 = sand.u32 %s94, 1
          %s369 = scalar_lea.sflag [#allocation4], %s368
          %s370 = sand.u32 %s94, 1
          %s371 = smul.addr %s370, 8
          %s372 = scalar_lea.vmem [#allocation7], %s371
          %374 = dma.done %s369, 128
        $region52: #{tpu_custom_call.1} parent=47 // pred_fallthru
          _
        // Predicated region
        $region53: #{tpu_custom_call.1} parent=47 // pred_check
          %p375 = pneg %p137
        $region54: #{tpu_custom_call.1} parent=47 // pred_check_branch
          %377 = sbr.rel (%p375) target = $region56
        $region55: #{tpu_custom_call.1} parent=47 // pred_region
          %p378 = scmp.lt.s32.totalorder %s28, 1
          %s379 = scalar_select %p378, %s28, 1
          %p380 = scmp.lt.s32.totalorder %s29, 0
          %s381 = scalar_select %p380, %s29, 0
          %s382 = sadd.s32 %s381, %s379
          %s383 = smul.addr %s382, 8
          %s384 = scalar_lea.vmem %s3, %s383
        $region56: #{tpu_custom_call.1} parent=47 // pred_fallthru
          _
      $region48: #{tpu_custom_call.1} parent=5 // pred_fallthru
        _
    $region6: #{tpu_custom_call.1} parent=1 // loop_footer
      %s21 = sadd.s32 1, %s17
    $region7: #{tpu_custom_call.1} parent=1 // loop_footer_branch
      %16 = sbr.rel target = $region3
    $region8: #{tpu_custom_call.1} parent=1 // loop_exit
      _
    %385 = vsyncpa [#allocation3], 1
    %s386 = scalar_lea.sflag [#allocation3], 1
    %387 = vsyncpa %s386, 1
    %388 = vsyncpa [#allocation6], 1
    %s389 = scalar_lea.sflag [#allocation6], 1
    %390 = vsyncpa %s389, 1
    %391 = vsyncpa [#allocation4], 1
    %s392 = scalar_lea.sflag [#allocation4], 1
    %393 = vsyncpa %s392, 1

</llo_original>
